<compile_context>
chip_gen: v7x
topology: tpu7x:2x2x1
jax: 0.10.0
libtpu: 0.0.40
codegen_flags: <defaults>
</compile_context>

<pallas_src>
import functools

import jax
import jax.numpy as jnp
from jax.experimental import pallas as pl
from jax.experimental.pallas import tpu as pltpu

NATOMS_PAD = 128  # per-action atom segment padded to one full 128-lane vreg INSIDE the kernel


def _round_up(x, m):
    return ((x + m - 1) // m) * m


def _valuenet_kernel(x_ref, w1_ref, b1_ref, w2_ref, b2_ref,
                     w3_ref, b3_ref, w4_ref, b4_ref, o_ref,
                     *, out_size, natoms, natoms_pad):
    bf16 = jnp.bfloat16
    f32 = jnp.float32

    x = x_ref[...].astype(bf16)

    # feature trunk: Linear + ReLU, Linear + ReLU  (bf16 MXU matmuls, f32 accumulate)
    h = jnp.dot(x, w1_ref[...], preferred_element_type=f32) + b1_ref[...]
    h = jnp.maximum(h, 0.0).astype(bf16)
    h = jnp.dot(h, w2_ref[...], preferred_element_type=f32) + b2_ref[...]
    h = jnp.maximum(h, 0.0).astype(bf16)

    # head: Linear(128,64) + ReLU, Linear(64, out_size*natoms_pad)
    h = jnp.dot(h, w3_ref[...], preferred_element_type=f32) + b3_ref[...]
    h = jnp.maximum(h, 0.0).astype(bf16)
    logits = jnp.dot(h, w4_ref[...], preferred_element_type=f32) + b4_ref[...]

    # Distributional softmax over each 128-lane-aligned atom segment.
    # Padded lanes carry logit -1e30 -> exp == 0, so full-width (unmasked) reduces
    # are safe.  Per-action direct stores: no concatenate / extra VMEM slab, and
    # only the valid `natoms` atoms ever reach the output (compact HBM output).
    for a in range(out_size):                       # tiny static loop, vreg-aligned slices
        lo = a * natoms_pad
        seg = logits[:, lo:lo + natoms_pad]                     # [tb, 128]
        m = jnp.max(seg, axis=-1, keepdims=True)                # XLU reduce
        e = jnp.exp(seg - m)                                    # EUP
        denom = jnp.sum(e, axis=-1, keepdims=True)              # XLU reduce
        p = e / denom                                           # exact (log-prob friendly)
        o_ref[:, a, :] = p[:, :natoms].astype(o_ref.dtype)      # direct compact store


def init_params(key, in_size, out_size, natoms, hidden=128, head_hidden=64):
    """PyTorch-style Linear init U(-1/sqrt(fan_in), 1/sqrt(fan_in)); weights [in, out]."""
    dims = [(in_size, hidden), (hidden, hidden),
            (hidden, head_hidden), (head_hidden, out_size * natoms)]
    params = []
    for i, (fan_in, fan_out) in enumerate(dims):
        kw, kb = jax.random.split(jax.random.fold_in(key, i))
        bound = 1.0 / (fan_in ** 0.5)
        w = jax.random.uniform(kw, (fan_in, fan_out), jnp.float32, -bound, bound)
        b = jax.random.uniform(kb, (1, fan_out), jnp.float32, -bound, bound)
        params += [w, b]
    return params


def prepare_params(params, out_size, natoms, natoms_pad=NATOMS_PAD):
    """One-time prep: cast weights to bf16 (MXU native) and pad the last layer so each
    action's atom block is 128-lane aligned inside the kernel. Padded bias lanes are
    -1e30 (kept in f32) => exp underflows to exactly 0, they never dilute the softmax."""
    w1, b1, w2, b2, w3, b3, w4, b4 = params
    head_hidden = w4.shape[0]

    w4p = jnp.zeros((head_hidden, out_size, natoms_pad), jnp.float32)
    b4p = jnp.full((1, out_size, natoms_pad), -1e30, jnp.float32)
    w4p = w4p.at[:, :, :natoms].set(w4.reshape(head_hidden, out_size, natoms))
    b4p = b4p.at[:, :, :natoms].set(b4.reshape(1, out_size, natoms))
    w4p = w4p.reshape(head_hidden, out_size * natoms_pad)
    b4p = b4p.reshape(1, out_size * natoms_pad)

    bf = jnp.bfloat16
    return [w1.astype(bf), b1, w2.astype(bf), b2,
            w3.astype(bf), b3, w4p.astype(bf), b4p]  # biases stay f32


@functools.partial(jax.jit, static_argnames=("out_size", "natoms", "block_b"))
def value_net_forward(state, params, *, out_size, natoms, block_b=1024):
    B, in_size = state.shape
    npad = NATOMS_PAD

    # ---- batch tiling -------------------------------------------------------
    #  * minimize padding: tb = round_up(ceil(B / nb), 8)
    #  * v7x: force >= 2 grid steps for non-trivial B so the "parallel" axis is
    #    sharded across both TensorCores (neutral on 1-TC v5e / v6e).
    nb = max(1, pl.cdiv(B, block_b))
    if nb < 2 and B >= 256:
        nb = 2
    tb = _round_up(pl.cdiv(B, nb), 8)
    bp = nb * tb
    if bp != B:
        state = jnp.pad(state, ((0, bp - B), (0, 0)))
    grid = (nb,)

    kernel = functools.partial(_valuenet_kernel, out_size=out_size,
                               natoms=natoms, natoms_pad=npad)

    # Weights/biases are tiny (~100 KB total): full-array blocks with a constant
    # index_map -> fetched once, VMEM-resident across all grid steps.
    param_specs = [pl.BlockSpec(p.shape, lambda i: (0, 0)) for p in params]

    # Advisory cost estimate so XLA can schedule neighbors around this call.
    flops = 2 * bp * (in_size * 128 + 128 * 128 + 128 * 64 + 64 * out_size * npad)
    transcendentals = bp * out_size * npad
    bytes_accessed = (bp * in_size * 4 + bp * out_size * natoms * 4
                      + sum(int(p.size) * p.dtype.itemsize for p in params))
    cost = pl.CostEstimate(flops=flops, transcendentals=transcendentals,
                           bytes_accessed=bytes_accessed)

    # Raise the scoped-VMEM limit only when tiles are big enough to need it
    # (v5e default scoped limit is 16 MiB).  Output tile pads to (tb, 8, 128) f32 in VMEM.
    est_tile_bytes = (2 * (tb * in_size * 4 + tb * 8 * 128 * 4)
                      + tb * (128 + 128 + 64 + out_size * npad) * 4)
    vmem_limit = 64 * 1024 * 1024 if est_tile_bytes > 12 * 1024 * 1024 else None

    out = pl.pallas_call(
        kernel,
        out_shape=jax.ShapeDtypeStruct((bp, out_size, natoms), jnp.float32),
        grid=grid,
        in_specs=[pl.BlockSpec((tb, in_size), lambda i: (i, 0))] + param_specs,
        out_specs=pl.BlockSpec((tb, out_size, natoms), lambda i: (i, 0, 0)),
        compiler_params=pltpu.CompilerParams(
            dimension_semantics=("parallel",),
            vmem_limit_bytes=vmem_limit),
        cost_estimate=cost,
    )(state, *params)

    return out if bp == B else out[:B]


def _reference_forward(state, prepared_params, out_size, natoms, natoms_pad=NATOMS_PAD):
    """Pure-JAX reference with the same bf16-matmul / f32-accumulate recipe."""
    w1, b1, w2, b2, w3, b3, w4, b4 = prepared_params
    f32 = jnp.float32
    h = state.astype(jnp.bfloat16)
    h = jnp.maximum(jnp.dot(h, w1, preferred_element_type=f32) + b1, 0.0).astype(jnp.bfloat16)
    h = jnp.maximum(jnp.dot(h, w2, preferred_element_type=f32) + b2, 0.0).astype(jnp.bfloat16)
    h = jnp.maximum(jnp.dot(h, w3, preferred_element_type=f32) + b3, 0.0).astype(jnp.bfloat16)
    logits = jnp.dot(h, w4, preferred_element_type=f32) + b4
    logits = logits.reshape(-1, out_size, natoms_pad)[:, :, :natoms]
    return jax.nn.softmax(logits, axis=-1)


if __name__ == "__main__":
    # Small, LunarLander-ish shapes: obs dim 8, 4 actions, 51 atoms, batch 8.
    B, IN_SIZE, OUT_SIZE, NATOMS = 8, 8, 4, 51

    key = jax.random.PRNGKey(0)
    k_state, k_params = jax.random.split(key)
    state = jax.random.normal(k_state, (B, IN_SIZE), jnp.float32)
    raw_params = init_params(k_params, IN_SIZE, OUT_SIZE, NATOMS)
    params = prepare_params(raw_params, OUT_SIZE, NATOMS)

    out = value_net_forward(state, params, out_size=OUT_SIZE, natoms=NATOMS)
    out = jax.block_until_ready(out)

    assert out.shape == (B, OUT_SIZE, NATOMS)
    ref = _reference_forward(state, params, OUT_SIZE, NATOMS)
    assert bool(jnp.allclose(out, ref, atol=2e-3, rtol=2e-3)), "mismatch vs JAX reference"
    # Each (batch, action) slice is a probability distribution.
    assert bool(jnp.allclose(jnp.sum(out, axis=-1), 1.0, atol=1e-3))
    assert bool(jnp.all(out >= 0.0))
    print("KERNEL_OK")
</pallas_src>

<mosaic_0001>
module attributes {stable_mosaic.version = 11 : i64} {
  func.func @_valuenet_kernel(%arg0: i32, %arg1: memref<8x8xf32, #tpu.memory_space<vmem>>, %arg2: memref<8x128xbf16, #tpu.memory_space<vmem>>, %arg3: memref<1x128xf32, #tpu.memory_space<vmem>>, %arg4: memref<128x128xbf16, #tpu.memory_space<vmem>>, %arg5: memref<1x128xf32, #tpu.memory_space<vmem>>, %arg6: memref<128x64xbf16, #tpu.memory_space<vmem>>, %arg7: memref<1x64xf32, #tpu.memory_space<vmem>>, %arg8: memref<64x512xbf16, #tpu.memory_space<vmem>>, %arg9: memref<1x512xf32, #tpu.memory_space<vmem>>, %arg10: memref<8x4x51xf32, #tpu.memory_space<vmem>>) attributes {dimension_semantics = [#tpu.dimension_semantics<parallel>], iteration_bounds = array<i64: 1>, scalar_prefetch = 0 : i64, scratch_operands = 0 : i64, tpu.core_type = #tpu.core_type<tc>, window_params = [{transform_indices = @transform_0, window_bounds = array<i64: 8, 8>}, {pipeline_mode = #tpu.pipeline_mode<synchronous>, transform_indices = @transform_1, window_bounds = array<i64: 8, 128>}, {pipeline_mode = #tpu.pipeline_mode<synchronous>, transform_indices = @transform_2, window_bounds = array<i64: 1, 128>}, {pipeline_mode = #tpu.pipeline_mode<synchronous>, transform_indices = @transform_3, window_bounds = array<i64: 128, 128>}, {pipeline_mode = #tpu.pipeline_mode<synchronous>, transform_indices = @transform_4, window_bounds = array<i64: 1, 128>}, {pipeline_mode = #tpu.pipeline_mode<synchronous>, transform_indices = @transform_5, window_bounds = array<i64: 128, 64>}, {pipeline_mode = #tpu.pipeline_mode<synchronous>, transform_indices = @transform_6, window_bounds = array<i64: 1, 64>}, {pipeline_mode = #tpu.pipeline_mode<synchronous>, transform_indices = @transform_7, window_bounds = array<i64: 64, 512>}, {pipeline_mode = #tpu.pipeline_mode<synchronous>, transform_indices = @transform_8, window_bounds = array<i64: 1, 512>}, {transform_indices = @transform_9, window_bounds = array<i64: 8, 4, 51>}]} {
    %c0 = arith.constant 0 : index
    %c0_0 = arith.constant 0 : index
    %0 = vector.load %arg1[%c0, %c0_0] : memref<8x8xf32, #tpu.memory_space<vmem>>, vector<8x8xf32>
    %1 = arith.truncf %0 : vector<8x8xf32> to vector<8x8xbf16>
    %c0_1 = arith.constant 0 : index
    %c0_2 = arith.constant 0 : index
    %2 = vector.load %arg2[%c0_1, %c0_2] : memref<8x128xbf16, #tpu.memory_space<vmem>>, vector<8x128xbf16>
    %cst = arith.constant dense<0.000000e+00> : vector<8x128xf32>
    %3 = tpu.matmul %1, %2, %cst {dimension_numbers = #tpu.dot_dimension_numbers<[1], [0], [0], [1], [0, 0, 1, 1], [], []>} : vector<8x8xbf16>, vector<8x128xbf16>, vector<8x128xf32> -> vector<8x128xf32>
    %c0_3 = arith.constant 0 : index
    %c0_4 = arith.constant 0 : index
    %4 = vector.load %arg3[%c0_3, %c0_4] : memref<1x128xf32, #tpu.memory_space<vmem>>, vector<1x128xf32>
    %5 = vector.broadcast %4 : vector<1x128xf32> to vector<8x128xf32>
    %6 = arith.addf %3, %5 : vector<8x128xf32>
    %cst_5 = arith.constant 0.000000e+00 : f32
    %7 = vector.broadcast %cst_5 : f32 to vector<8x128xf32>
    %8 = arith.maximumf %6, %7 : vector<8x128xf32>
    %9 = arith.truncf %8 : vector<8x128xf32> to vector<8x128xbf16>
    %c0_6 = arith.constant 0 : index
    %c0_7 = arith.constant 0 : index
    %10 = vector.load %arg4[%c0_6, %c0_7] : memref<128x128xbf16, #tpu.memory_space<vmem>>, vector<128x128xbf16>
    %cst_8 = arith.constant dense<0.000000e+00> : vector<8x128xf32>
    %11 = tpu.matmul %9, %10, %cst_8 {dimension_numbers = #tpu.dot_dimension_numbers<[1], [0], [0], [1], [0, 0, 1, 1], [], []>} : vector<8x128xbf16>, vector<128x128xbf16>, vector<8x128xf32> -> vector<8x128xf32>
    %c0_9 = arith.constant 0 : index
    %c0_10 = arith.constant 0 : index
    %12 = vector.load %arg5[%c0_9, %c0_10] : memref<1x128xf32, #tpu.memory_space<vmem>>, vector<1x128xf32>
    %13 = vector.broadcast %12 : vector<1x128xf32> to vector<8x128xf32>
    %14 = arith.addf %11, %13 : vector<8x128xf32>
    %cst_11 = arith.constant 0.000000e+00 : f32
    %15 = vector.broadcast %cst_11 : f32 to vector<8x128xf32>
    %16 = arith.maximumf %14, %15 : vector<8x128xf32>
    %17 = arith.truncf %16 : vector<8x128xf32> to vector<8x128xbf16>
    %c0_12 = arith.constant 0 : index
    %c0_13 = arith.constant 0 : index
    %18 = vector.load %arg6[%c0_12, %c0_13] : memref<128x64xbf16, #tpu.memory_space<vmem>>, vector<128x64xbf16>
    %cst_14 = arith.constant dense<0.000000e+00> : vector<8x64xf32>
    %19 = tpu.matmul %17, %18, %cst_14 {dimension_numbers = #tpu.dot_dimension_numbers<[1], [0], [0], [1], [0, 0, 1, 1], [], []>} : vector<8x128xbf16>, vector<128x64xbf16>, vector<8x64xf32> -> vector<8x64xf32>
    %c0_15 = arith.constant 0 : index
    %c0_16 = arith.constant 0 : index
    %20 = vector.load %arg7[%c0_15, %c0_16] : memref<1x64xf32, #tpu.memory_space<vmem>>, vector<1x64xf32>
    %21 = vector.broadcast %20 : vector<1x64xf32> to vector<8x64xf32>
    %22 = arith.addf %19, %21 : vector<8x64xf32>
    %cst_17 = arith.constant 0.000000e+00 : f32
    %23 = vector.broadcast %cst_17 : f32 to vector<8x64xf32>
    %24 = arith.maximumf %22, %23 : vector<8x64xf32>
    %25 = arith.truncf %24 : vector<8x64xf32> to vector<8x64xbf16>
    %c0_18 = arith.constant 0 : index
    %c0_19 = arith.constant 0 : index
    %26 = vector.load %arg8[%c0_18, %c0_19] : memref<64x512xbf16, #tpu.memory_space<vmem>>, vector<64x512xbf16>
    %cst_20 = arith.constant dense<0.000000e+00> : vector<8x512xf32>
    %27 = tpu.matmul %25, %26, %cst_20 {dimension_numbers = #tpu.dot_dimension_numbers<[1], [0], [0], [1], [0, 0, 1, 1], [], []>} : vector<8x64xbf16>, vector<64x512xbf16>, vector<8x512xf32> -> vector<8x512xf32>
    %c0_21 = arith.constant 0 : index
    %c0_22 = arith.constant 0 : index
    %28 = vector.load %arg9[%c0_21, %c0_22] : memref<1x512xf32, #tpu.memory_space<vmem>>, vector<1x512xf32>
    %29 = vector.broadcast %28 : vector<1x512xf32> to vector<8x512xf32>
    %30 = arith.addf %27, %29 : vector<8x512xf32>
    %31 = vector.extract_strided_slice %30 {offsets = [0, 0], sizes = [8, 128], strides = [1, 1]} : vector<8x512xf32> to vector<8x128xf32>
    %cst_23 = arith.constant dense<0xFF800000> : vector<8xf32>
    %32 = vector.multi_reduction <maximumf>, %31, %cst_23 [1] : vector<8x128xf32> to vector<8xf32>
    %33 = vector.shape_cast %32 : vector<8xf32> to vector<8x1xf32>
    %34 = vector.broadcast %33 : vector<8x1xf32> to vector<8x128xf32>
    %35 = arith.subf %31, %34 : vector<8x128xf32>
    %36 = math.exp %35 : vector<8x128xf32>
    %cst_24 = arith.constant dense<0.000000e+00> : vector<8xf32>
    %37 = vector.multi_reduction <add>, %36, %cst_24 [1] : vector<8x128xf32> to vector<8xf32>
    %38 = vector.shape_cast %37 : vector<8xf32> to vector<8x1xf32>
    %39 = vector.broadcast %38 : vector<8x1xf32> to vector<8x128xf32>
    %40 = arith.divf %36, %39 : vector<8x128xf32>
    %41 = vector.extract_strided_slice %40 {offsets = [0, 0], sizes = [8, 51], strides = [1, 1]} : vector<8x128xf32> to vector<8x51xf32>
    %c0_25 = arith.constant 0 : index
    %c0_26 = arith.constant 0 : index
    %c0_27 = arith.constant 0 : index
    %42 = vector.load %arg10[%c0_25, %c0_26, %c0_27] : memref<8x4x51xf32, #tpu.memory_space<vmem>>, vector<8x1x51xf32>
    %43 = vector.shape_cast %42 : vector<8x1x51xf32> to vector<8x51xf32>
    %44 = vector.shape_cast %41 : vector<8x51xf32> to vector<8x1x51xf32>
    tpu.vector_store %arg10[%c0_25, %c0_26, %c0_27], %44 {strides = array<i32>} : memref<8x4x51xf32, #tpu.memory_space<vmem>>, vector<8x1x51xf32>,
    %45 = vector.extract_strided_slice %30 {offsets = [0, 128], sizes = [8, 128], strides = [1, 1]} : vector<8x512xf32> to vector<8x128xf32>
    %cst_28 = arith.constant dense<0xFF800000> : vector<8xf32>
    %46 = vector.multi_reduction <maximumf>, %45, %cst_28 [1] : vector<8x128xf32> to vector<8xf32>
    %47 = vector.shape_cast %46 : vector<8xf32> to vector<8x1xf32>
    %48 = vector.broadcast %47 : vector<8x1xf32> to vector<8x128xf32>
    %49 = arith.subf %45, %48 : vector<8x128xf32>
    %50 = math.exp %49 : vector<8x128xf32>
    %cst_29 = arith.constant dense<0.000000e+00> : vector<8xf32>
    %51 = vector.multi_reduction <add>, %50, %cst_29 [1] : vector<8x128xf32> to vector<8xf32>
    %52 = vector.shape_cast %51 : vector<8xf32> to vector<8x1xf32>
    %53 = vector.broadcast %52 : vector<8x1xf32> to vector<8x128xf32>
    %54 = arith.divf %50, %53 : vector<8x128xf32>
    %55 = vector.extract_strided_slice %54 {offsets = [0, 0], sizes = [8, 51], strides = [1, 1]} : vector<8x128xf32> to vector<8x51xf32>
    %c0_30 = arith.constant 0 : index
    %c1 = arith.constant 1 : index
    %c0_31 = arith.constant 0 : index
    %56 = vector.load %arg10[%c0_30, %c1, %c0_31] : memref<8x4x51xf32, #tpu.memory_space<vmem>>, vector<8x1x51xf32>
    %57 = vector.shape_cast %56 : vector<8x1x51xf32> to vector<8x51xf32>
    %58 = vector.shape_cast %55 : vector<8x51xf32> to vector<8x1x51xf32>
    tpu.vector_store %arg10[%c0_30, %c1, %c0_31], %58 {strides = array<i32>} : memref<8x4x51xf32, #tpu.memory_space<vmem>>, vector<8x1x51xf32>,
    %59 = vector.extract_strided_slice %30 {offsets = [0, 256], sizes = [8, 128], strides = [1, 1]} : vector<8x512xf32> to vector<8x128xf32>
    %cst_32 = arith.constant dense<0xFF800000> : vector<8xf32>
    %60 = vector.multi_reduction <maximumf>, %59, %cst_32 [1] : vector<8x128xf32> to vector<8xf32>
    %61 = vector.shape_cast %60 : vector<8xf32> to vector<8x1xf32>
    %62 = vector.broadcast %61 : vector<8x1xf32> to vector<8x128xf32>
    %63 = arith.subf %59, %62 : vector<8x128xf32>
    %64 = math.exp %63 : vector<8x128xf32>
    %cst_33 = arith.constant dense<0.000000e+00> : vector<8xf32>
    %65 = vector.multi_reduction <add>, %64, %cst_33 [1] : vector<8x128xf32> to vector<8xf32>
    %66 = vector.shape_cast %65 : vector<8xf32> to vector<8x1xf32>
    %67 = vector.broadcast %66 : vector<8x1xf32> to vector<8x128xf32>
    %68 = arith.divf %64, %67 : vector<8x128xf32>
    %69 = vector.extract_strided_slice %68 {offsets = [0, 0], sizes = [8, 51], strides = [1, 1]} : vector<8x128xf32> to vector<8x51xf32>
    %c0_34 = arith.constant 0 : index
    %c2 = arith.constant 2 : index
    %c0_35 = arith.constant 0 : index
    %70 = vector.load %arg10[%c0_34, %c2, %c0_35] : memref<8x4x51xf32, #tpu.memory_space<vmem>>, vector<8x1x51xf32>
    %71 = vector.shape_cast %70 : vector<8x1x51xf32> to vector<8x51xf32>
    %72 = vector.shape_cast %69 : vector<8x51xf32> to vector<8x1x51xf32>
    tpu.vector_store %arg10[%c0_34, %c2, %c0_35], %72 {strides = array<i32>} : memref<8x4x51xf32, #tpu.memory_space<vmem>>, vector<8x1x51xf32>,
    %73 = vector.extract_strided_slice %30 {offsets = [0, 384], sizes = [8, 128], strides = [1, 1]} : vector<8x512xf32> to vector<8x128xf32>
    %cst_36 = arith.constant dense<0xFF800000> : vector<8xf32>
    %74 = vector.multi_reduction <maximumf>, %73, %cst_36 [1] : vector<8x128xf32> to vector<8xf32>
    %75 = vector.shape_cast %74 : vector<8xf32> to vector<8x1xf32>
    %76 = vector.broadcast %75 : vector<8x1xf32> to vector<8x128xf32>
    %77 = arith.subf %73, %76 : vector<8x128xf32>
    %78 = math.exp %77 : vector<8x128xf32>
    %cst_37 = arith.constant dense<0.000000e+00> : vector<8xf32>
    %79 = vector.multi_reduction <add>, %78, %cst_37 [1] : vector<8x128xf32> to vector<8xf32>
    %80 = vector.shape_cast %79 : vector<8xf32> to vector<8x1xf32>
    %81 = vector.broadcast %80 : vector<8x1xf32> to vector<8x128xf32>
    %82 = arith.divf %78, %81 : vector<8x128xf32>
    %83 = vector.extract_strided_slice %82 {offsets = [0, 0], sizes = [8, 51], strides = [1, 1]} : vector<8x128xf32> to vector<8x51xf32>
    %c0_38 = arith.constant 0 : index
    %c3 = arith.constant 3 : index
    %c0_39 = arith.constant 0 : index
    %84 = vector.load %arg10[%c0_38, %c3, %c0_39] : memref<8x4x51xf32, #tpu.memory_space<vmem>>, vector<8x1x51xf32>
    %85 = vector.shape_cast %84 : vector<8x1x51xf32> to vector<8x51xf32>
    %86 = vector.shape_cast %83 : vector<8x51xf32> to vector<8x1x51xf32>
    tpu.vector_store %arg10[%c0_38, %c3, %c0_39], %86 {strides = array<i32>} : memref<8x4x51xf32, #tpu.memory_space<vmem>>, vector<8x1x51xf32>,
    return
  }
  func.func @transform_0(%arg0: i32) -> (i32, i32) {
    %c0_i32 = arith.constant 0 : i32
    %c0_i32_0 = arith.constant 0 : i32
    return %arg0, %c0_i32 : i32, i32
  }
  func.func @transform_1(%arg0: i32) -> (i32, i32) {
    %c0_i32 = arith.constant 0 : i32
    %c0_i32_0 = arith.constant 0 : i32
    %c0_i32_1 = arith.constant 0 : i32
    return %c0_i32, %c0_i32_0 : i32, i32
  }
  func.func @transform_2(%arg0: i32) -> (i32, i32) {
    %c0_i32 = arith.constant 0 : i32
    %c0_i32_0 = arith.constant 0 : i32
    %c0_i32_1 = arith.constant 0 : i32
    return %c0_i32, %c0_i32_0 : i32, i32
  }
  func.func @transform_3(%arg0: i32) -> (i32, i32) {
    %c0_i32 = arith.constant 0 : i32
    %c0_i32_0 = arith.constant 0 : i32
    %c0_i32_1 = arith.constant 0 : i32
    return %c0_i32, %c0_i32_0 : i32, i32
  }
  func.func @transform_4(%arg0: i32) -> (i32, i32) {
    %c0_i32 = arith.constant 0 : i32
    %c0_i32_0 = arith.constant 0 : i32
    %c0_i32_1 = arith.constant 0 : i32
    return %c0_i32, %c0_i32_0 : i32, i32
  }
  func.func @transform_5(%arg0: i32) -> (i32, i32) {
    %c0_i32 = arith.constant 0 : i32
    %c0_i32_0 = arith.constant 0 : i32
    %c0_i32_1 = arith.constant 0 : i32
    return %c0_i32, %c0_i32_0 : i32, i32
  }
  func.func @transform_6(%arg0: i32) -> (i32, i32) {
    %c0_i32 = arith.constant 0 : i32
    %c0_i32_0 = arith.constant 0 : i32
    %c0_i32_1 = arith.constant 0 : i32
    return %c0_i32, %c0_i32_0 : i32, i32
  }
  func.func @transform_7(%arg0: i32) -> (i32, i32) {
    %c0_i32 = arith.constant 0 : i32
    %c0_i32_0 = arith.constant 0 : i32
    %c0_i32_1 = arith.constant 0 : i32
    return %c0_i32, %c0_i32_0 : i32, i32
  }
  func.func @transform_8(%arg0: i32) -> (i32, i32) {
    %c0_i32 = arith.constant 0 : i32
    %c0_i32_0 = arith.constant 0 : i32
    %c0_i32_1 = arith.constant 0 : i32
    return %c0_i32, %c0_i32_0 : i32, i32
  }
  func.func @transform_9(%arg0: i32) -> (i32, i32, i32) {
    %c0_i32 = arith.constant 0 : i32
    %c0_i32_0 = arith.constant 0 : i32
    %c0_i32_1 = arith.constant 0 : i32
    return %arg0, %c0_i32, %c0_i32_0 : i32, i32, i32
  }
}

</mosaic_0001>

<llo_original>
// kernel: value_net_forward.1
$region0: #{value_net_forward.1}
  #allocation0 [shape = 'u32[]', space=smem, size = 0x4, offset = 0x4, fixed_abs, tag = 'smem constant byte address 0x4 - core index']
  #allocation1 [shape = 'u32[144,128]{1,0:T(1,128)}', space=vmem, size = 0x12000, scoped, tag = 'internal scratch']
  %s0 = inlined_call_operand.vmem [shape: f32[8,8], index: 0, kind: input, shape index: {}]
  %s1 = inlined_call_operand.vmem [shape: bf16[8,128], index: 1, kind: input, shape index: {}]
  %s2 = inlined_call_operand.vmem [shape: f32[1,128], index: 2, kind: input, shape index: {}]
  %s3 = inlined_call_operand.vmem [shape: bf16[128,128], index: 3, kind: input, shape index: {}]
  %s4 = inlined_call_operand.vmem [shape: f32[1,128], index: 4, kind: input, shape index: {}]
  %s5 = inlined_call_operand.vmem [shape: bf16[128,64], index: 5, kind: input, shape index: {}]
  %s6 = inlined_call_operand.vmem [shape: f32[1,64], index: 6, kind: input, shape index: {}]
  %s7 = inlined_call_operand.hbm [shape: bf16[64,512], index: 7, kind: input, shape index: {}]
  %s8 = inlined_call_operand.vmem [shape: f32[1,512], index: 8, kind: input, shape index: {}]
  %s9 = inlined_call_operand.hbm [shape: f32[8,4,51], index: 9, kind: output, shape index: {}]
  %s10 = sld [smem:[#allocation0]]
  $region50: #{value_net_forward.1} parent=0
    _
  %s12 = ssub.s32 1, %s10
  %s13 = scalar_select 0, %s12, %s10
  $region1: #{value_net_forward.1} parent=0
    #allocation2 [shape = 'u8[65536]{0}', space=vmem, size = 0x10000, scoped, tag = 'input window, operand 7, single buffered']
    #allocation3 [shape = 's32[1]{0}', space=sflag, size = 0x4, scoped, tag = 'scoped memory for value_net_forward.1']
    #allocation4 [shape = 's32[1]{0}', space=sflag, size = 0x4, scoped, tag = 'scoped memory for value_net_forward.1']
    #allocation5 [shape = 'u8[16384]{0}', space=vmem, size = 0x4000, scoped, tag = 'output window, operand 0, single buffered']
    %14 = vsyncpa [#allocation3], 0
    %15 = vsyncpa [#allocation4], 0
    // Predicated region
    $region2: #{value_net_forward.1} parent=1 // pred_check
      _
    $region3: #{value_net_forward.1} parent=1 // pred_check_branch
      %17 = sbr.rel (0) target = $region5
    $region4: #{value_net_forward.1} parent=1 // pred_region
      _
    $region5: #{value_net_forward.1} parent=1 // pred_fallthru
      _
    // Predicated region
    $region6: #{value_net_forward.1} parent=1 // pred_check
      _
    $region7: #{value_net_forward.1} parent=1 // pred_check_branch
      %19 = sbr.rel (0) target = $region9
    $region8: #{value_net_forward.1} parent=1 // pred_region
      _
    $region9: #{value_net_forward.1} parent=1 // pred_fallthru
      _
    // Predicated region
    $region10: #{value_net_forward.1} parent=1 // pred_check
      _
    $region11: #{value_net_forward.1} parent=1 // pred_check_branch
      %21 = sbr.rel (0) target = $region13
    $region12: #{value_net_forward.1} parent=1 // pred_region
      _
    $region13: #{value_net_forward.1} parent=1 // pred_fallthru
      _
    // Predicated region
    $region14: #{value_net_forward.1} parent=1 // pred_check
      _
    $region15: #{value_net_forward.1} parent=1 // pred_check_branch
      %23 = sbr.rel (0) target = $region17
    $region16: #{value_net_forward.1} parent=1 // pred_region
      _
    $region17: #{value_net_forward.1} parent=1 // pred_fallthru
      _
    // Predicated region
    $region18: #{value_net_forward.1} parent=1 // pred_check
      _
    $region19: #{value_net_forward.1} parent=1 // pred_check_branch
      %25 = sbr.rel (0) target = $region21
    $region20: #{value_net_forward.1} parent=1 // pred_region
      _
    $region21: #{value_net_forward.1} parent=1 // pred_fallthru
      _
    // Predicated region
    $region22: #{value_net_forward.1} parent=1 // pred_check
      _
    $region23: #{value_net_forward.1} parent=1 // pred_check_branch
      %27 = sbr.rel (0) target = $region25
    $region24: #{value_net_forward.1} parent=1 // pred_region
      _
    $region25: #{value_net_forward.1} parent=1 // pred_fallthru
      _
    // Predicated region
    $region26: #{value_net_forward.1} parent=1 // pred_check
      _
    $region27: #{value_net_forward.1} parent=1 // pred_check_branch
      %29 = sbr.rel (0) target = $region29
    $region28: #{value_net_forward.1} parent=1 // pred_region
      _
    $region29: #{value_net_forward.1} parent=1 // pred_fallthru
      _
    // Predicated region
    $region30: #{value_net_forward.1} parent=1 // pred_check
      _
    $region31: #{value_net_forward.1} parent=1 // pred_check_branch
      %31 = sbr.rel (0) target = $region33
    $region32: #{value_net_forward.1} parent=1 // pred_region
      %s33 = ssub.s32 2048, 2048
      %34 = vsyncadd [#allocation3], %s33
      %s35 = sshll.u32 [#allocation2], 4
      %s36 = int_to_ptr.vmem [resolvable:$true] %s35
      %41 = dma.hbm_to_vmem [thread:$0]  %s7, 2048, %s36, [#allocation3], 256, 256, 16
    $region33: #{value_net_forward.1} parent=1 // pred_fallthru
      _
    // Predicated region
    $region34: #{value_net_forward.1} parent=1 // pred_check
      _
    $region35: #{value_net_forward.1} parent=1 // pred_check_branch
      %43 = sbr.rel (0) target = $region37
    $region36: #{value_net_forward.1} parent=1 // pred_region
      _
    $region37: #{value_net_forward.1} parent=1 // pred_fallthru
      _
    // Predicated region
    $region38: #{value_net_forward.1} parent=1 // pred_check
      _
    $region39: #{value_net_forward.1} parent=1 // pred_check_branch
      %45 = sbr.rel (0) target = $region41
    $region40: #{value_net_forward.1} parent=1 // pred_region
      %46 = dma.done [#allocation3], 2048
    $region41: #{value_net_forward.1} parent=1 // pred_fallthru
      _
    %v48 = vld [vmem:[%s0] sm:$0xff]
    %v49 = vpack.c.bf16 %v48, %v48
    %v50 = vld [vmem:[%s1] sm:$0xf]
    %v51 = vld [vmem:[%s2] sm:$0x1]
    %v53 = vlaneseq
    %v54 = vshrl.u32 %v53, 7
    %v55 = vsub.s32 0, %v54
    %v56 = vrot.slane %v51, %v55
    %vm58 = vcmask 64512
    %v60 = vsel %vm58, %v49, 0
    %vm62 = vcmask 1043456
    %v64 = vsel %vm62, %v50, 0
    %66 = vmatprep.subr.bf16.mxu0 0
    %67 = vmatpush1.bf16.msra.mxu0 %v64
    %68 = vmatprep.subr.bf16.mxu0 0
    %69 = vmatpush1.bf16.msra.mxu0 0
    %70 = vmatprep.subr.bf16.mxu0 0
    %71 = vmatpush1.bf16.msra.mxu0 0
    %72 = vmatprep.subr.bf16.mxu0 0
    %73 = vmatpush1.bf16.msra.mxu0 0
    %74 = vmatprep.subr.bf16.mxu0 0
    %75 = vmatpush1.bf16.msra.mxu0 0
    %76 = vmatprep.subr.bf16.mxu0 0
    %77 = vmatpush1.bf16.msra.mxu0 0
    %78 = vmatprep.subr.bf16.mxu0 0
    %79 = vmatpush1.bf16.msra.mxu0 0
    %80 = vmatprep.subr.bf16.mxu0 0
    %81 = vmatpush1.bf16.msra.mxu0 0
    %82 = vmatprep.subr.bf16.mxu0 0
    %83 = vmatpush1.bf16.msra.mxu0 0
    %84 = vmatprep.subr.bf16.mxu0 0
    %85 = vmatpush1.bf16.msra.mxu0 0
    %86 = vmatprep.subr.bf16.mxu0 0
    %87 = vmatpush1.bf16.msra.mxu0 0
    %88 = vmatprep.subr.bf16.mxu0 0
    %89 = vmatpush1.bf16.msra.mxu0 0
    %90 = vmatprep.subr.bf16.mxu0 0
    %91 = vmatpush1.bf16.msra.mxu0 0
    %92 = vmatprep.subr.bf16.mxu0 0
    %93 = vmatpush1.bf16.msra.mxu0 0
    %94 = vmatprep.subr.bf16.mxu0 0
    %95 = vmatpush1.bf16.msra.mxu0 0
    %96 = vmatprep.subr.bf16.mxu0 0
    %97 = vmatpush1.bf16.msra.mxu0 0
    %98 = vmatprep.mubr.bf16.mxu0 0
    %99 = vmatmul.mubr.bf16.gmra.mrb[0].mxu0 %v60
    %v100 = vpop.f32.mrb[0].mxu0
    %v101 = vadd.f32 %v56, %v100
    %v102 = vpop.f32.mrb[0].mxu0
    %v103 = vpop.f32.mrb[0].mxu0
    %v104 = vpop.f32.mrb[0].mxu0
    %105 = vdwg.mxu0
    %v106 = vmax.f32 %v101, 0.0
    %v107 = vpack.c.bf16 %v106, %v106
    %v108 = vld [vmem:[%s3] sm:$0xf]
    %v109 = vld [vmem:[%s3 + $0x4] sm:$0xf]
    %v110 = vld [vmem:[%s3 + $0x8] sm:$0xf]
    %v111 = vld [vmem:[%s3 + $0xc] sm:$0xf]
    %v112 = vld [vmem:[%s3 + $0x10] sm:$0xf]
    %v113 = vld [vmem:[%s3 + $0x14] sm:$0xf]
    %v114 = vld [vmem:[%s3 + $0x18] sm:$0xf]
    %v115 = vld [vmem:[%s3 + $0x1c] sm:$0xf]
    %v116 = vld [vmem:[%s3 + $0x20] sm:$0xf]
    %v117 = vld [vmem:[%s3 + $0x24] sm:$0xf]
    %v118 = vld [vmem:[%s3 + $0x28] sm:$0xf]
    %v119 = vld [vmem:[%s3 + $0x2c] sm:$0xf]
    %v120 = vld [vmem:[%s3 + $0x30] sm:$0xf]
    %v121 = vld [vmem:[%s3 + $0x34] sm:$0xf]
    %v122 = vld [vmem:[%s3 + $0x38] sm:$0xf]
    %v123 = vld [vmem:[%s3 + $0x3c] sm:$0xf]
    %v124 = vld [vmem:[%s4] sm:$0x1]
    %v126 = vlaneseq
    %v127 = vshrl.u32 %v126, 7
    %v128 = vsub.s32 0, %v127
    %v129 = vrot.slane %v124, %v128
    %v147 = vunpack.c.l.b16 %v108
    %v148 = vunpack.c.l.b16 %v109
    %v149 = vunpack.c.l.b16 %v110
    %v150 = vunpack.c.l.b16 %v111
    %v151 = vunpack.c.l.b16 %v112
    %v152 = vunpack.c.l.b16 %v113
    %v153 = vunpack.c.l.b16 %v114
    %v154 = vunpack.c.l.b16 %v115
    %v155 = vunpack.c.l.b16 %v116
    %v156 = vunpack.c.l.b16 %v117
    %v157 = vunpack.c.l.b16 %v118
    %v158 = vunpack.c.l.b16 %v119
    %v159 = vunpack.c.l.b16 %v120
    %v160 = vunpack.c.l.b16 %v121
    %v161 = vunpack.c.l.b16 %v122
    %v162 = vunpack.c.l.b16 %v123
    %v163 = vpack.c.b16 %v148, %v147
    %v164 = vpack.c.b16 %v150, %v149
    %v165 = vpack.c.b16 %v152, %v151
    %v166 = vpack.c.b16 %v154, %v153
    %v167 = vpack.c.b16 %v156, %v155
    %v168 = vpack.c.b16 %v158, %v157
    %v169 = vpack.c.b16 %v160, %v159
    %v170 = vpack.c.b16 %v162, %v161
    %179 = vmatprep.subr.bf16.mxu0 0
    %180 = vmatpush1.bf16.msra.mxu0 %v163
    %181 = vmatprep.subr.bf16.mxu0 0
    %182 = vmatpush1.bf16.msra.mxu0 %v164
    %183 = vmatprep.subr.bf16.mxu0 0
    %184 = vmatpush1.bf16.msra.mxu0 %v165
    %185 = vmatprep.subr.bf16.mxu0 0
    %186 = vmatpush1.bf16.msra.mxu0 %v166
    %187 = vmatprep.subr.bf16.mxu0 0
    %188 = vmatpush1.bf16.msra.mxu0 %v167
    %189 = vmatprep.subr.bf16.mxu0 0
    %190 = vmatpush1.bf16.msra.mxu0 %v168
    %191 = vmatprep.subr.bf16.mxu0 0
    %192 = vmatpush1.bf16.msra.mxu0 %v169
    %193 = vmatprep.subr.bf16.mxu0 0
    %194 = vmatpush1.bf16.msra.mxu0 %v170
    %195 = vmatprep.subr.bf16.mxu0 0
    %196 = vmatpush1.bf16.msra.mxu0 0
    %197 = vmatprep.subr.bf16.mxu0 0
    %198 = vmatpush1.bf16.msra.mxu0 0
    %199 = vmatprep.subr.bf16.mxu0 0
    %200 = vmatpush1.bf16.msra.mxu0 0
    %201 = vmatprep.subr.bf16.mxu0 0
    %202 = vmatpush1.bf16.msra.mxu0 0
    %203 = vmatprep.subr.bf16.mxu0 0
    %204 = vmatpush1.bf16.msra.mxu0 0
    %205 = vmatprep.subr.bf16.mxu0 0
    %206 = vmatpush1.bf16.msra.mxu0 0
    %207 = vmatprep.subr.bf16.mxu0 0
    %208 = vmatpush1.bf16.msra.mxu0 0
    %209 = vmatprep.subr.bf16.mxu0 0
    %210 = vmatpush1.bf16.msra.mxu0 0
    %211 = vmatprep.mubr.bf16.mxu0 0
    %212 = vmatmul.mubr.bf16.gmra.mrb[0].mxu0 %v107
    %v213 = vpop.f32.mrb[0].mxu0
    %v214 = vadd.f32 %v129, %v213
    %v215 = vpop.f32.mrb[0].mxu0
    %v216 = vpop.f32.mrb[0].mxu0
    %v217 = vpop.f32.mrb[0].mxu0
    %218 = vdwg.mxu0
    %v219 = vmax.f32 %v214, 0.0
    %v220 = vpack.c.bf16 %v219, %v219
    %v221 = vld [vmem:[%s5] sm:$0xf]
    %v222 = vld [vmem:[%s5 + $0x4] sm:$0xf]
    %v223 = vld [vmem:[%s5 + $0x8] sm:$0xf]
    %v224 = vld [vmem:[%s5 + $0xc] sm:$0xf]
    %v225 = vld [vmem:[%s5 + $0x10] sm:$0xf]
    %v226 = vld [vmem:[%s5 + $0x14] sm:$0xf]
    %v227 = vld [vmem:[%s5 + $0x18] sm:$0xf]
    %v228 = vld [vmem:[%s5 + $0x1c] sm:$0xf]
    %v229 = vld [vmem:[%s5 + $0x20] sm:$0xf]
    %v230 = vld [vmem:[%s5 + $0x24] sm:$0xf]
    %v231 = vld [vmem:[%s5 + $0x28] sm:$0xf]
    %v232 = vld [vmem:[%s5 + $0x2c] sm:$0xf]
    %v233 = vld [vmem:[%s5 + $0x30] sm:$0xf]
    %v234 = vld [vmem:[%s5 + $0x34] sm:$0xf]
    %v235 = vld [vmem:[%s5 + $0x38] sm:$0xf]
    %v236 = vld [vmem:[%s5 + $0x3c] sm:$0xf]
    %v237 = vld [vmem:[%s6] sm:$0x1]
    %v239 = vlaneseq
    %v240 = vshrl.u32 %v239, 7
    %v241 = vsub.s32 0, %v240
    %v242 = vrot.slane %v237, %v241
    %v260 = vunpack.c.l.b16 %v221
    %v261 = vunpack.c.l.b16 %v222
    %v262 = vunpack.c.l.b16 %v223
    %v263 = vunpack.c.l.b16 %v224
    %v264 = vunpack.c.l.b16 %v225
    %v265 = vunpack.c.l.b16 %v226
    %v266 = vunpack.c.l.b16 %v227
    %v267 = vunpack.c.l.b16 %v228
    %v268 = vunpack.c.l.b16 %v229
    %v269 = vunpack.c.l.b16 %v230
    %v270 = vunpack.c.l.b16 %v231
    %v271 = vunpack.c.l.b16 %v232
    %v272 = vunpack.c.l.b16 %v233
    %v273 = vunpack.c.l.b16 %v234
    %v274 = vunpack.c.l.b16 %v235
    %v275 = vunpack.c.l.b16 %v236
    %v276 = vpack.c.b16 %v261, %v260
    %v277 = vpack.c.b16 %v263, %v262
    %v278 = vpack.c.b16 %v265, %v264
    %v279 = vpack.c.b16 %v267, %v266
    %v280 = vpack.c.b16 %v269, %v268
    %v281 = vpack.c.b16 %v271, %v270
    %v282 = vpack.c.b16 %v273, %v272
    %v283 = vpack.c.b16 %v275, %v274
    %292 = vmatprep.subr.bf16.mxu0 0
    %293 = vmatpush1.bf16.msra.mxu0 %v276
    %294 = vmatprep.subr.bf16.mxu0 0
    %295 = vmatpush1.bf16.msra.mxu0 %v277
    %296 = vmatprep.subr.bf16.mxu0 0
    %297 = vmatpush1.bf16.msra.mxu0 %v278
    %298 = vmatprep.subr.bf16.mxu0 0
    %299 = vmatpush1.bf16.msra.mxu0 %v279
    %300 = vmatprep.subr.bf16.mxu0 0
    %301 = vmatpush1.bf16.msra.mxu0 %v280
    %302 = vmatprep.subr.bf16.mxu0 0
    %303 = vmatpush1.bf16.msra.mxu0 %v281
    %304 = vmatprep.subr.bf16.mxu0 0
    %305 = vmatpush1.bf16.msra.mxu0 %v282
    %306 = vmatprep.subr.bf16.mxu0 0
    %307 = vmatpush1.bf16.msra.mxu0 %v283
    %308 = vmatprep.subr.bf16.mxu0 0
    %309 = vmatpush1.bf16.msra.mxu0 0
    %310 = vmatprep.subr.bf16.mxu0 0
    %311 = vmatpush1.bf16.msra.mxu0 0
    %312 = vmatprep.subr.bf16.mxu0 0
    %313 = vmatpush1.bf16.msra.mxu0 0
    %314 = vmatprep.subr.bf16.mxu0 0
    %315 = vmatpush1.bf16.msra.mxu0 0
    %316 = vmatprep.subr.bf16.mxu0 0
    %317 = vmatpush1.bf16.msra.mxu0 0
    %318 = vmatprep.subr.bf16.mxu0 0
    %319 = vmatpush1.bf16.msra.mxu0 0
    %320 = vmatprep.subr.bf16.mxu0 0
    %321 = vmatpush1.bf16.msra.mxu0 0
    %322 = vmatprep.subr.bf16.mxu0 0
    %323 = vmatpush1.bf16.msra.mxu0 0
    %324 = vmatprep.mubr.bf16.mxu0 0
    %325 = vmatmul.mubr.bf16.gmra.mrb[0].mxu0 %v220
    %v326 = vpop.f32.mrb[0].mxu0
    %v327 = vadd.f32 %v242, %v326
    %v328 = vpop.f32.mrb[0].mxu0
    %v329 = vpop.f32.mrb[0].mxu0
    %v330 = vpop.f32.mrb[0].mxu0
    %331 = vdwg.mxu0
    %v332 = vmax.f32 %v327, 0.0
    %v333 = vpack.c.bf16 %v332, %v332
    %v334 = vld [vmem:[#allocation2] sm:$0xff]
    %v335 = vld [vmem:[#allocation2 + $0x8] sm:$0xff]
    %v336 = vld [vmem:[#allocation2 + $0x10] sm:$0xff]
    %v337 = vld [vmem:[#allocation2 + $0x18] sm:$0xff]
    %v338 = vld [vmem:[#allocation2 + $0x20] sm:$0xff]
    %v339 = vld [vmem:[#allocation2 + $0x28] sm:$0xff]
    %v340 = vld [vmem:[#allocation2 + $0x30] sm:$0xff]
    %v341 = vld [vmem:[#allocation2 + $0x38] sm:$0xff]
    %v342 = vld [vmem:[#allocation2 + $0x40] sm:$0xff]
    %v343 = vld [vmem:[#allocation2 + $0x48] sm:$0xff]
    %v344 = vld [vmem:[#allocation2 + $0x50] sm:$0xff]
    %v345 = vld [vmem:[#allocation2 + $0x58] sm:$0xff]
    %v346 = vld [vmem:[#allocation2 + $0x60] sm:$0xff]
    %v347 = vld [vmem:[#allocation2 + $0x68] sm:$0xff]
    %v348 = vld [vmem:[#allocation2 + $0x70] sm:$0xff]
    %v349 = vld [vmem:[#allocation2 + $0x78] sm:$0xff]
    %v350 = vld [vmem:[%s8] sm:$0xf]
    %v352 = vlaneseq
    %v353 = vshrl.u32 %v352, 7
    %v354 = vsub.s32 0, %v353
    %v355 = vrot.slane %v350, %v354
    %v356 = vlaneseq
    %v357 = vshrl.u32 %v356, 7
    %v358 = vsub.s32 1, %v357
    %v359 = vrot.slane %v350, %v358
    %v360 = vlaneseq
    %v361 = vshrl.u32 %v360, 7
    %v362 = vsub.s32 2, %v361
    %v363 = vrot.slane %v350, %v362
    %v364 = vlaneseq
    %v365 = vshrl.u32 %v364, 7
    %v366 = vsub.s32 3, %v365
    %v367 = vrot.slane %v350, %v366
    %v388 = vunpack.c.l.b16 %v334
    %v389 = vunpack.c.h.b16 %v334
    %v390 = vunpack.c.l.b16 %v335
    %v391 = vunpack.c.h.b16 %v335
    %v392 = vunpack.c.l.b16 %v336
    %v393 = vunpack.c.h.b16 %v336
    %v394 = vunpack.c.l.b16 %v337
    %v395 = vunpack.c.h.b16 %v337
    %v396 = vunpack.c.l.b16 %v338
    %v397 = vunpack.c.h.b16 %v338
    %v398 = vunpack.c.l.b16 %v339
    %v399 = vunpack.c.h.b16 %v339
    %v400 = vunpack.c.l.b16 %v340
    %v401 = vunpack.c.h.b16 %v340
    %v402 = vunpack.c.l.b16 %v341
    %v403 = vunpack.c.h.b16 %v341
    %v404 = vunpack.c.l.b16 %v342
    %v405 = vunpack.c.h.b16 %v342
    %v406 = vunpack.c.l.b16 %v343
    %v407 = vunpack.c.h.b16 %v343
    %v408 = vunpack.c.l.b16 %v344
    %v409 = vunpack.c.h.b16 %v344
    %v410 = vunpack.c.l.b16 %v345
    %v411 = vunpack.c.h.b16 %v345
    %v412 = vunpack.c.l.b16 %v346
    %v413 = vunpack.c.h.b16 %v346
    %v414 = vunpack.c.l.b16 %v347
    %v415 = vunpack.c.h.b16 %v347
    %v416 = vunpack.c.l.b16 %v348
    %v417 = vunpack.c.h.b16 %v348
    %v418 = vunpack.c.l.b16 %v349
    %v419 = vunpack.c.h.b16 %v349
    %v420 = vpack.c.b16 %v392, %v388
    %v421 = vpack.c.b16 %v393, %v389
    %v422 = vpack.c.b16 %v394, %v390
    %v423 = vpack.c.b16 %v395, %v391
    %v424 = vpack.c.b16 %v400, %v396
    %v425 = vpack.c.b16 %v401, %v397
    %v426 = vpack.c.b16 %v402, %v398
    %v427 = vpack.c.b16 %v403, %v399
    %v428 = vpack.c.b16 %v408, %v404
    %v429 = vpack.c.b16 %v409, %v405
    %v430 = vpack.c.b16 %v410, %v406
    %v431 = vpack.c.b16 %v411, %v407
    %v432 = vpack.c.b16 %v416, %v412
    %v433 = vpack.c.b16 %v417, %v413
    %v434 = vpack.c.b16 %v418, %v414
    %v435 = vpack.c.b16 %v419, %v415
    %vm452 = vcmask 523264
    %v454 = vsel %vm452, %v333, 0
    %456 = vmatprep.subr.bf16.mxu0 %v421
    %457 = vmatpush1.bf16.msra.mxu0 %v420
    %458 = vmatprep.subr.bf16.mxu0 %v425
    %459 = vmatpush1.bf16.msra.mxu0 %v424
    %460 = vmatprep.subr.bf16.mxu0 %v429
    %461 = vmatpush1.bf16.msra.mxu0 %v428
    %462 = vmatprep.subr.bf16.mxu0 %v433
    %463 = vmatpush1.bf16.msra.mxu0 %v432
    %464 = vmatprep.subr.bf16.mxu0 0
    %465 = vmatpush1.bf16.msra.mxu0 0
    %466 = vmatprep.subr.bf16.mxu0 0
    %467 = vmatpush1.bf16.msra.mxu0 0
    %468 = vmatprep.subr.bf16.mxu0 0
    %469 = vmatpush1.bf16.msra.mxu0 0
    %470 = vmatprep.subr.bf16.mxu0 0
    %471 = vmatpush1.bf16.msra.mxu0 0
    %472 = vmatprep.subr.bf16.mxu0 0
    %473 = vmatpush1.bf16.msra.mxu0 0
    %474 = vmatprep.subr.bf16.mxu0 0
    %475 = vmatpush1.bf16.msra.mxu0 0
    %476 = vmatprep.subr.bf16.mxu0 0
    %477 = vmatpush1.bf16.msra.mxu0 0
    %478 = vmatprep.subr.bf16.mxu0 0
    %479 = vmatpush1.bf16.msra.mxu0 0
    %480 = vmatprep.subr.bf16.mxu0 0
    %481 = vmatpush1.bf16.msra.mxu0 0
    %482 = vmatprep.subr.bf16.mxu0 0
    %483 = vmatpush1.bf16.msra.mxu0 0
    %484 = vmatprep.subr.bf16.mxu0 0
    %485 = vmatpush1.bf16.msra.mxu0 0
    %486 = vmatprep.subr.bf16.mxu0 0
    %487 = vmatpush1.bf16.msra.mxu0 0
    %488 = vmatprep.mubr.bf16.mxu0 0
    %489 = vmatmul.mubr.bf16.gmra.mrb[0].mxu0 %v454
    %v490 = vpop.f32.mrb[0].mxu0
    %v491 = vadd.f32 %v355, %v490
    %v492 = vpop.f32.mrb[0].mxu0
    %v493 = vadd.f32 %v359, %v492
    %v494 = vpop.f32.mrb[0].mxu0
    %v495 = vpop.f32.mrb[0].mxu0
    %496 = vdwg.mxu0
    %497 = vmatprep.subr.bf16.mxu0 %v423
    %498 = vmatpush1.bf16.msra.mxu0 %v422
    %499 = vmatprep.subr.bf16.mxu0 %v427
    %500 = vmatpush1.bf16.msra.mxu0 %v426
    %501 = vmatprep.subr.bf16.mxu0 %v431
    %502 = vmatpush1.bf16.msra.mxu0 %v430
    %503 = vmatprep.subr.bf16.mxu0 %v435
    %504 = vmatpush1.bf16.msra.mxu0 %v434
    %505 = vmatprep.subr.bf16.mxu0 0
    %506 = vmatpush1.bf16.msra.mxu0 0
    %507 = vmatprep.subr.bf16.mxu0 0
    %508 = vmatpush1.bf16.msra.mxu0 0
    %509 = vmatprep.subr.bf16.mxu0 0
    %510 = vmatpush1.bf16.msra.mxu0 0
    %511 = vmatprep.subr.bf16.mxu0 0
    %512 = vmatpush1.bf16.msra.mxu0 0
    %513 = vmatprep.subr.bf16.mxu0 0
    %514 = vmatpush1.bf16.msra.mxu0 0
    %515 = vmatprep.subr.bf16.mxu0 0
    %516 = vmatpush1.bf16.msra.mxu0 0
    %517 = vmatprep.subr.bf16.mxu0 0
    %518 = vmatpush1.bf16.msra.mxu0 0
    %519 = vmatprep.subr.bf16.mxu0 0
    %520 = vmatpush1.bf16.msra.mxu0 0
    %521 = vmatprep.subr.bf16.mxu0 0
    %522 = vmatpush1.bf16.msra.mxu0 0
    %523 = vmatprep.subr.bf16.mxu0 0
    %524 = vmatpush1.bf16.msra.mxu0 0
    %525 = vmatprep.subr.bf16.mxu0 0
    %526 = vmatpush1.bf16.msra.mxu0 0
    %527 = vmatprep.subr.bf16.mxu0 0
    %528 = vmatpush1.bf16.msra.mxu0 0
    %529 = vmatprep.mubr.bf16.mxu0 0
    %530 = vmatmul.mubr.bf16.gmra.mrb[0].mxu0 %v454
    %v531 = vpop.f32.mrb[0].mxu0
    %v532 = vadd.f32 %v363, %v531
    %v533 = vpop.f32.mrb[0].mxu0
    %v534 = vadd.f32 %v367, %v533
    %v535 = vpop.f32.mrb[0].mxu0
    %v536 = vpop.f32.mrb[0].mxu0
    %537 = vdwg.mxu0
    %538 = vmax.xlane.f32.xlu0 %v491
    %v539 = vpop.xlane.xlu0 %538
    %v540 = vsub.f32 %v491, %v539
    %v541 = vmul.f32 %v540, 1.442695
    %v542 = vpow.pop %v541
    %543 = vadd.xlane.f32.xlu0 %v542
    %v544 = vpop.xlane.xlu0 %543
    %v545 = vrcp.pop %v544
    %v546 = vmul.f32 %v542, %v545
    %v548 = vcombine.high %v546, %v546
    %v550 = vunpack.c.l.s4 1966171168
    %v551 = vunpack.c.0.s8 %v550
    %v552 = vlaneseq
    %v553 = vshrl.u32 %v552, 7
    %v554 = vsub.s32 %v551, %v553
    %v555 = vrot.slane %v546, %v554
    %v557 = vunpack.c.l.s4 1966171168
    %v558 = vunpack.c.0.s8 %v557
    %v559 = vlaneseq
    %v560 = vshrl.u32 %v559, 7
    %v561 = vsub.s32 %v558, %v560
    %v562 = vrot.slane %v548, %v561
    %v563 = vcombine.high %v555, %v555
    %v564 = vcombine.high %v562, %v562
    %v566 = vunpack.c.l.s4 1966171168
    %v567 = vunpack.c.0.s8 %v566
    %v568 = vlaneseq
    %v569 = vshrl.u32 %v568, 7
    %v570 = vsub.s32 %v567, %v569
    %v571 = vrot.slane %v555, %v570
    %v573 = vunpack.c.l.s4 1966171168
    %v574 = vunpack.c.0.s8 %v573
    %v575 = vlaneseq
    %v576 = vshrl.u32 %v575, 7
    %v577 = vsub.s32 %v574, %v576
    %v578 = vrot.slane %v562, %v577
    %v580 = vunpack.c.l.s4 1966171168
    %v581 = vunpack.c.0.s8 %v580
    %v582 = vlaneseq
    %v583 = vshrl.u32 %v582, 7
    %v584 = vsub.s32 %v581, %v583
    %v585 = vrot.slane %v563, %v584
    %v587 = vunpack.c.l.s4 1966171168
    %v588 = vunpack.c.0.s8 %v587
    %v589 = vlaneseq
    %v590 = vshrl.u32 %v589, 7
    %v591 = vsub.s32 %v588, %v590
    %v592 = vrot.slane %v564, %v591
    %v593 = vcombine.high %v571, %v571
    %v594 = vcombine.high %v578, %v578
    %v595 = vcombine.high %v585, %v585
    %v596 = vcombine.high %v592, %v592
    %vm605 = vcmask 409600
    %606 = vst.msk [vmem:[#allocation5] sm:$0x1] %vm605, %v571
    %607 = vst.msk [vmem:[#allocation5 + $0x4] sm:$0x1] %vm605, %v585
    %608 = vst.msk [vmem:[#allocation5 + $0x8] sm:$0x1] %vm605, %v593
    %609 = vst.msk [vmem:[#allocation5 + $0xc] sm:$0x1] %vm605, %v595
    %610 = vst.msk [vmem:[#allocation5 + $0x10] sm:$0x1] %vm605, %v578
    %611 = vst.msk [vmem:[#allocation5 + $0x14] sm:$0x1] %vm605, %v592
    %612 = vst.msk [vmem:[#allocation5 + $0x18] sm:$0x1] %vm605, %v594
    %613 = vst.msk [vmem:[#allocation5 + $0x1c] sm:$0x1] %vm605, %v596
    %614 = vmax.xlane.f32.xlu0 %v493
    %v615 = vpop.xlane.xlu0 %614
    %v616 = vsub.f32 %v493, %v615
    %v617 = vmul.f32 %v616, 1.442695
    %v618 = vpow.pop %v617
    %619 = vadd.xlane.f32.xlu0 %v618
    %v620 = vpop.xlane.xlu0 %619
    %v621 = vrcp.pop %v620
    %v622 = vmul.f32 %v618, %v621
    %v624 = vcombine.high %v622, %v622
    %v626 = vunpack.c.l.s4 1966171168
    %v627 = vunpack.c.0.s8 %v626
    %v628 = vlaneseq
    %v629 = vshrl.u32 %v628, 7
    %v630 = vsub.s32 %v627, %v629
    %v631 = vrot.slane %v622, %v630
    %v633 = vunpack.c.l.s4 1966171168
    %v634 = vunpack.c.0.s8 %v633
    %v635 = vlaneseq
    %v636 = vshrl.u32 %v635, 7
    %v637 = vsub.s32 %v634, %v636
    %v638 = vrot.slane %v624, %v637
    %v639 = vcombine.high %v631, %v631
    %v640 = vcombine.high %v638, %v638
    %v642 = vunpack.c.l.s4 1966171168
    %v643 = vunpack.c.0.s8 %v642
    %v644 = vlaneseq
    %v645 = vshrl.u32 %v644, 7
    %v646 = vsub.s32 %v643, %v645
    %v647 = vrot.slane %v631, %v646
    %v649 = vunpack.c.l.s4 1966171168
    %v650 = vunpack.c.0.s8 %v649
    %v651 = vlaneseq
    %v652 = vshrl.u32 %v651, 7
    %v653 = vsub.s32 %v650, %v652
    %v654 = vrot.slane %v638, %v653
    %v656 = vunpack.c.l.s4 1966171168
    %v657 = vunpack.c.0.s8 %v656
    %v658 = vlaneseq
    %v659 = vshrl.u32 %v658, 7
    %v660 = vsub.s32 %v657, %v659
    %v661 = vrot.slane %v639, %v660
    %v663 = vunpack.c.l.s4 1966171168
    %v664 = vunpack.c.0.s8 %v663
    %v665 = vlaneseq
    %v666 = vshrl.u32 %v665, 7
    %v667 = vsub.s32 %v664, %v666
    %v668 = vrot.slane %v640, %v667
    %v669 = vcombine.high %v647, %v647
    %v670 = vcombine.high %v654, %v654
    %v671 = vcombine.high %v661, %v661
    %v672 = vcombine.high %v668, %v668
    %681 = vst.msk [vmem:[#allocation5 + $0x1] sm:$0x1] %vm605, %v647
    %682 = vst.msk [vmem:[#allocation5 + $0x5] sm:$0x1] %vm605, %v661
    %683 = vst.msk [vmem:[#allocation5 + $0x9] sm:$0x1] %vm605, %v669
    %684 = vst.msk [vmem:[#allocation5 + $0xd] sm:$0x1] %vm605, %v671
    %685 = vst.msk [vmem:[#allocation5 + $0x11] sm:$0x1] %vm605, %v654
    %686 = vst.msk [vmem:[#allocation5 + $0x15] sm:$0x1] %vm605, %v668
    %687 = vst.msk [vmem:[#allocation5 + $0x19] sm:$0x1] %vm605, %v670
    %688 = vst.msk [vmem:[#allocation5 + $0x1d] sm:$0x1] %vm605, %v672
    %689 = vmax.xlane.f32.xlu0 %v532
    %v690 = vpop.xlane.xlu0 %689
    %v691 = vsub.f32 %v532, %v690
    %v692 = vmul.f32 %v691, 1.442695
    %v693 = vpow.pop %v692
    %694 = vadd.xlane.f32.xlu0 %v693
    %v695 = vpop.xlane.xlu0 %694
    %v696 = vrcp.pop %v695
    %v697 = vmul.f32 %v693, %v696
    %v699 = vcombine.high %v697, %v697
    %v701 = vunpack.c.l.s4 1966171168
    %v702 = vunpack.c.0.s8 %v701
    %v703 = vlaneseq
    %v704 = vshrl.u32 %v703, 7
    %v705 = vsub.s32 %v702, %v704
    %v706 = vrot.slane %v697, %v705
    %v708 = vunpack.c.l.s4 1966171168
    %v709 = vunpack.c.0.s8 %v708
    %v710 = vlaneseq
    %v711 = vshrl.u32 %v710, 7
    %v712 = vsub.s32 %v709, %v711
    %v713 = vrot.slane %v699, %v712
    %v714 = vcombine.high %v706, %v706
    %v715 = vcombine.high %v713, %v713
    %v717 = vunpack.c.l.s4 1966171168
    %v718 = vunpack.c.0.s8 %v717
    %v719 = vlaneseq
    %v720 = vshrl.u32 %v719, 7
    %v721 = vsub.s32 %v718, %v720
    %v722 = vrot.slane %v706, %v721
    %v724 = vunpack.c.l.s4 1966171168
    %v725 = vunpack.c.0.s8 %v724
    %v726 = vlaneseq
    %v727 = vshrl.u32 %v726, 7
    %v728 = vsub.s32 %v725, %v727
    %v729 = vrot.slane %v713, %v728
    %v731 = vunpack.c.l.s4 1966171168
    %v732 = vunpack.c.0.s8 %v731
    %v733 = vlaneseq
    %v734 = vshrl.u32 %v733, 7
    %v735 = vsub.s32 %v732, %v734
    %v736 = vrot.slane %v714, %v735
    %v738 = vunpack.c.l.s4 1966171168
    %v739 = vunpack.c.0.s8 %v738
    %v740 = vlaneseq
    %v741 = vshrl.u32 %v740, 7
    %v742 = vsub.s32 %v739, %v741
    %v743 = vrot.slane %v715, %v742
    %v744 = vcombine.high %v722, %v722
    %v745 = vcombine.high %v729, %v729
    %v746 = vcombine.high %v736, %v736
    %v747 = vcombine.high %v743, %v743
    %756 = vst.msk [vmem:[#allocation5 + $0x2] sm:$0x1] %vm605, %v722
    %757 = vst.msk [vmem:[#allocation5 + $0x6] sm:$0x1] %vm605, %v736
    %758 = vst.msk [vmem:[#allocation5 + $0xa] sm:$0x1] %vm605, %v744
    %759 = vst.msk [vmem:[#allocation5 + $0xe] sm:$0x1] %vm605, %v746
    %760 = vst.msk [vmem:[#allocation5 + $0x12] sm:$0x1] %vm605, %v729
    %761 = vst.msk [vmem:[#allocation5 + $0x16] sm:$0x1] %vm605, %v743
    %762 = vst.msk [vmem:[#allocation5 + $0x1a] sm:$0x1] %vm605, %v745
    %763 = vst.msk [vmem:[#allocation5 + $0x1e] sm:$0x1] %vm605, %v747
    %764 = vmax.xlane.f32.xlu0 %v534
    %v765 = vpop.xlane.xlu0 %764
    %v766 = vsub.f32 %v534, %v765
    %v767 = vmul.f32 %v766, 1.442695
    %v768 = vpow.pop %v767
    %769 = vadd.xlane.f32.xlu0 %v768
    %v770 = vpop.xlane.xlu0 %769
    %v771 = vrcp.pop %v770
    %v772 = vmul.f32 %v768, %v771
    %v774 = vcombine.high %v772, %v772
    %v776 = vunpack.c.l.s4 1966171168
    %v777 = vunpack.c.0.s8 %v776
    %v778 = vlaneseq
    %v779 = vshrl.u32 %v778, 7
    %v780 = vsub.s32 %v777, %v779
    %v781 = vrot.slane %v772, %v780
    %v783 = vunpack.c.l.s4 1966171168
    %v784 = vunpack.c.0.s8 %v783
    %v785 = vlaneseq
    %v786 = vshrl.u32 %v785, 7
    %v787 = vsub.s32 %v784, %v786
    %v788 = vrot.slane %v774, %v787
    %v789 = vcombine.high %v781, %v781
    %v790 = vcombine.high %v788, %v788
    %v792 = vunpack.c.l.s4 1966171168
    %v793 = vunpack.c.0.s8 %v792
    %v794 = vlaneseq
    %v795 = vshrl.u32 %v794, 7
    %v796 = vsub.s32 %v793, %v795
    %v797 = vrot.slane %v781, %v796
    %v799 = vunpack.c.l.s4 1966171168
    %v800 = vunpack.c.0.s8 %v799
    %v801 = vlaneseq
    %v802 = vshrl.u32 %v801, 7
    %v803 = vsub.s32 %v800, %v802
    %v804 = vrot.slane %v788, %v803
    %v806 = vunpack.c.l.s4 1966171168
    %v807 = vunpack.c.0.s8 %v806
    %v808 = vlaneseq
    %v809 = vshrl.u32 %v808, 7
    %v810 = vsub.s32 %v807, %v809
    %v811 = vrot.slane %v789, %v810
    %v813 = vunpack.c.l.s4 1966171168
    %v814 = vunpack.c.0.s8 %v813
    %v815 = vlaneseq
    %v816 = vshrl.u32 %v815, 7
    %v817 = vsub.s32 %v814, %v816
    %v818 = vrot.slane %v790, %v817
    %v819 = vcombine.high %v797, %v797
    %v820 = vcombine.high %v804, %v804
    %v821 = vcombine.high %v811, %v811
    %v822 = vcombine.high %v818, %v818
    %831 = vst.msk [vmem:[#allocation5 + $0x3] sm:$0x1] %vm605, %v797
    %832 = vst.msk [vmem:[#allocation5 + $0x7] sm:$0x1] %vm605, %v811
    %833 = vst.msk [vmem:[#allocation5 + $0xb] sm:$0x1] %vm605, %v819
    %834 = vst.msk [vmem:[#allocation5 + $0xf] sm:$0x1] %vm605, %v821
    %835 = vst.msk [vmem:[#allocation5 + $0x13] sm:$0x1] %vm605, %v804
    %836 = vst.msk [vmem:[#allocation5 + $0x17] sm:$0x1] %vm605, %v818
    %837 = vst.msk [vmem:[#allocation5 + $0x1b] sm:$0x1] %vm605, %v820
    %838 = vst.msk [vmem:[#allocation5 + $0x1f] sm:$0x1] %vm605, %v822
    // Predicated region
    $region42: #{value_net_forward.1} parent=1 // pred_check
      _
    $region43: #{value_net_forward.1} parent=1 // pred_check_branch
      %840 = sbr.rel (0) target = $region45
    $region44: #{value_net_forward.1} parent=1 // pred_region
      %s842 = ssub.s32 512, 512
      %843 = vsyncadd [#allocation4], %s842
      %s844 = sshll.u32 [#allocation5], 4
      %s845 = int_to_ptr.vmem [resolvable:$true] %s844
      %850 = dma.vmem_to_hbm [thread:$0]  %s845, 512, %s9, [#allocation4], 64, 64, 4
    $region45: #{value_net_forward.1} parent=1 // pred_fallthru
      _
    // Predicated region
    $region46: #{value_net_forward.1} parent=1 // pred_check
      _
    $region47: #{value_net_forward.1} parent=1 // pred_check_branch
      %852 = sbr.rel (0) target = $region49
    $region48: #{value_net_forward.1} parent=1 // pred_region
      %853 = dma.done [#allocation4], 512
    $region49: #{value_net_forward.1} parent=1 // pred_fallthru
      _
    %854 = vsyncpa [#allocation3], 1
    %855 = vsyncpa [#allocation4], 1

</llo_original>
